<compile_context>
chip_gen: v7x
topology: tpu7x:2x2x1
jax: 0.10.0
libtpu: 0.0.40
codegen_flags: <defaults>
</compile_context>

<pallas_src>
import jax
import jax.numpy as jnp
from jax.experimental import pallas as pl
from jax.experimental.pallas import tpu as pltpu


def conv1x1_kernel(w_ref, x_ref, o_ref):
    # One MXU matmul per Cout-block: [80, 960] @ [960, 196] -> [80, 196],
    # bf16 operands, f32 accumulation, cast to the (f32) output dtype.
    o_ref[...] = jnp.dot(
        w_ref[...], x_ref[...], preferred_element_type=jnp.float32
    ).astype(o_ref.dtype)


@jax.jit
def conv2d_1x1(x_nchw, w_oihw):
    """1x1 stride-1 conv, no bias. x_nchw: [1, Cin, H, W], w_oihw: [Cout, Cin, 1, 1]."""
    n, cin, h, w = x_nchw.shape
    cout = w_oihw.shape[0]
    assert n == 1  # W @ X formulation below assumes N == 1 (true for this module)
    hw = h * w

    # Free reshapes of the native layouts (no permutes), then bf16 at the boundary.
    x2d = x_nchw.reshape(cin, hw).astype(jnp.bfloat16)      # [Cin, H*W]
    w2d = w_oihw.reshape(cout, cin).astype(jnp.bfloat16)    # [Cout, Cin]

    n_blocks = 2                      # lets v7x megacore split Cout; cheap loop elsewhere
    assert cout % n_blocks == 0 and (cout // n_blocks) % 8 == 0

    cost = pl.CostEstimate(
        flops=2 * cout * cin * hw,
        transcendentals=0,
        bytes_accessed=x2d.size * 2 + w2d.size * 2 + cout * hw * 4,
    )

    out2d = pl.pallas_call(
        conv1x1_kernel,
        out_shape=jax.ShapeDtypeStruct((cout, hw), x_nchw.dtype),
        grid=(n_blocks,),
        in_specs=[
            pl.BlockSpec((cout // n_blocks, cin), lambda i: (i, 0)),  # W block
            pl.BlockSpec((cin, hw), lambda i: (0, 0)),                # X (whole)
        ],
        out_specs=pl.BlockSpec((cout // n_blocks, hw), lambda i: (i, 0)),
        compiler_params=pltpu.CompilerParams(
            dimension_semantics=("parallel",),
        ),
        cost_estimate=cost,
    )(w2d, x2d)

    # Free reshape back to NCHW.
    return out2d.reshape(n, cout, h, w)


if __name__ == "__main__":
    key = jax.random.PRNGKey(0)
    k_x, k_w = jax.random.split(key)

    # Shapes implied by the module: input [1, 960, 14, 14], Conv2d(960, 160, 1x1, bias=False).
    x = jax.random.normal(k_x, (1, 960, 14, 14), dtype=jnp.float32)
    w = jax.random.normal(k_w, (160, 960, 1, 1), dtype=jnp.float32) * (1.0 / jnp.sqrt(960.0))

    out = conv2d_1x1(x, w)
    jax.block_until_ready(out)

    assert out.shape == (1, 160, 14, 14)

    # Reference with matching (bf16 in, f32 acc) precision -> tight tolerance.
    ref_bf16 = jnp.einsum(
        "nchw,oc->nohw",
        x.astype(jnp.bfloat16),
        w.reshape(160, 960).astype(jnp.bfloat16),
        preferred_element_type=jnp.float32,
    )
    assert jnp.allclose(out, ref_bf16, atol=1e-3, rtol=1e-3)

    # Sanity check against the full-f32 reference (looser: bf16 input rounding).
    ref_f32 = jnp.einsum("nchw,oc->nohw", x, w.reshape(160, 960))
    assert jnp.allclose(out, ref_f32, atol=5e-2, rtol=5e-2)

    print("KERNEL_OK")
</pallas_src>

<mosaic_0001>
module attributes {stable_mosaic.version = 11 : i64} {
  func.func @conv1x1_kernel(%arg0: i32, %arg1: memref<80x960xbf16, #tpu.memory_space<vmem>>, %arg2: memref<960x196xbf16, #tpu.memory_space<vmem>>, %arg3: memref<80x196xf32, #tpu.memory_space<vmem>>) attributes {dimension_semantics = [#tpu.dimension_semantics<parallel>], iteration_bounds = array<i64: 2>, scalar_prefetch = 0 : i64, scratch_operands = 0 : i64, tpu.core_type = #tpu.core_type<tc>, window_params = [{transform_indices = @transform_0, window_bounds = array<i64: 80, 960>}, {pipeline_mode = #tpu.pipeline_mode<synchronous>, transform_indices = @transform_1, window_bounds = array<i64: 960, 196>}, {transform_indices = @transform_2, window_bounds = array<i64: 80, 196>}]} {
    %c0 = arith.constant 0 : index
    %c0_0 = arith.constant 0 : index
    %0 = vector.load %arg1[%c0, %c0_0] : memref<80x960xbf16, #tpu.memory_space<vmem>>, vector<80x960xbf16>
    %c0_1 = arith.constant 0 : index
    %c0_2 = arith.constant 0 : index
    %1 = vector.load %arg2[%c0_1, %c0_2] : memref<960x196xbf16, #tpu.memory_space<vmem>>, vector<960x196xbf16>
    %cst = arith.constant dense<0.000000e+00> : vector<80x196xf32>
    %2 = tpu.matmul %0, %1, %cst {dimension_numbers = #tpu.dot_dimension_numbers<[1], [0], [0], [1], [0, 0, 1, 1], [], []>} : vector<80x960xbf16>, vector<960x196xbf16>, vector<80x196xf32> -> vector<80x196xf32>
    %c0_3 = arith.constant 0 : index
    %c0_4 = arith.constant 0 : index
    %3 = vector.load %arg3[%c0_3, %c0_4] : memref<80x196xf32, #tpu.memory_space<vmem>>, vector<80x196xf32>
    tpu.vector_store %arg3[%c0_3, %c0_4], %2 {strides = array<i32>} : memref<80x196xf32, #tpu.memory_space<vmem>>, vector<80x196xf32>,
    return
  }
  func.func @transform_0(%arg0: i32) -> (i32, i32) {
    %c0_i32 = arith.constant 0 : i32
    %c0_i32_0 = arith.constant 0 : i32
    return %arg0, %c0_i32 : i32, i32
  }
  func.func @transform_1(%arg0: i32) -> (i32, i32) {
    %c0_i32 = arith.constant 0 : i32
    %c0_i32_0 = arith.constant 0 : i32
    %c0_i32_1 = arith.constant 0 : i32
    return %c0_i32, %c0_i32_0 : i32, i32
  }
  func.func @transform_2(%arg0: i32) -> (i32, i32) {
    %c0_i32 = arith.constant 0 : i32
    %c0_i32_0 = arith.constant 0 : i32
    return %arg0, %c0_i32 : i32, i32
  }
}

</mosaic_0001>

<llo_original>
// kernel: conv2d_1x1.1
$region0: #{conv2d_1x1.1}
  #allocation0 [shape = 'u32[]', space=smem, size = 0x4, offset = 0x4, fixed_abs, tag = 'smem constant byte address 0x4 - core index']
  #allocation1 [shape = 'u32[144,128]{1,0:T(1,128)}', space=vmem, size = 0x12000, scoped, tag = 'internal scratch']
  %s0 = inlined_call_operand.vmem [shape: bf16[160,960], index: 0, kind: input, shape index: {}]
  %s1 = inlined_call_operand.vmem [shape: bf16[960,196], index: 1, kind: input, shape index: {}]
  %s2 = inlined_call_operand.vmem [shape: f32[160,196], index: 2, kind: output, shape index: {}]
  %s3 = sld [smem:[#allocation0]]
  $region41: #{conv2d_1x1.1} parent=0
    _
  %s5 = ssub.s32 1, %s3
  %s6 = scalar_select 0, %s5, %s3
  loop: start=0, step=1, limit=4
  $region2: #{conv2d_1x1.1} parent=0 // loop_pre_header
    _
  $region3: #{conv2d_1x1.1} parent=0 // loop_header
    %s8 = sphi 0, %s12
    %p9 = scmp.ge.s32.totalorder %s8, 4
    %s18 = sphi 0, %s20
    %s21 = sphi 0, %s18
    %s22 = sphi 0, %s21
    %s38 = sphi 0, %s22
    %s42 = sphi 0, %s42
    %s44 = sphi 0, %s42
    %s45 = sphi 0, %s44
    %s59 = sphi 0, %s45
    %s65 = sphi 0, %s67
    %s68 = sphi 0, %s65
    %s69 = sphi 0, %s68
    %s85 = sphi 0, %s69
  $region4: #{conv2d_1x1.1} parent=0 // loop_header_branch
    %11 = sbr.rel (%p9) target = $region8
  $region5: #{conv2d_1x1.1} parent=0 // loop_body
    %s13 = ssub.s32 %s8, 1
    %s14 = ssub.s32 %s8, 2
    %s15 = sadd.s32 %s8, 1
    %s16 = ssub.s32 %s8, %s15
    %p17 = scmp.eq.s32.totalorder %s16, 0
    %s19 = sadd.s32 %s18, 1
    %s20 = scalar_select %p17, %s18, %s19
    %p23 = pneg %p17
    %p24 = scmp.eq.s32.totalorder %s8, 1
    %p25 = por %p23, %p24
    %p26 = scmp.ne.s32.totalorder %s18, %s21
    %p27 = scmp.eq.s32.totalorder %s8, 0
    %p28 = por %p26, %p27
    %p29 = scmp.ne.s32.totalorder %s18, %s21
    %p30 = scmp.eq.s32.totalorder %s13, 1
    %p31 = por %p29, %p30
    %p32 = scmp.ne.s32.totalorder %s21, %s22
    %p33 = scmp.eq.s32.totalorder %s13, 0
    %p34 = por %p32, %p33
    %p35 = scmp.ne.s32.totalorder %s21, %s22
    %p36 = scmp.eq.s32.totalorder %s14, 1
    %p37 = por %p35, %p36
    %p39 = scmp.ne.s32.totalorder %s22, %s38
    %p40 = scmp.eq.s32.totalorder %s14, 0
    %p41 = por %p39, %p40
    %s43 = sadd.s32 %s42, 1
    %p46 = scmp.eq.s32.totalorder %s8, 1
    %p47 = scmp.ne.s32.totalorder %s42, %s44
    %p48 = scmp.eq.s32.totalorder %s8, 0
    %p49 = por %p47, %p48
    %p50 = scmp.ne.s32.totalorder %s42, %s44
    %p51 = scmp.eq.s32.totalorder %s13, 1
    %p52 = por %p50, %p51
    %p53 = scmp.ne.s32.totalorder %s44, %s45
    %p54 = scmp.eq.s32.totalorder %s13, 0
    %p55 = por %p53, %p54
    %p56 = scmp.ne.s32.totalorder %s44, %s45
    %p57 = scmp.eq.s32.totalorder %s14, 1
    %p58 = por %p56, %p57
    %p60 = scmp.ne.s32.totalorder %s45, %s59
    %p61 = scmp.eq.s32.totalorder %s14, 0
    %p62 = por %p60, %p61
    %s63 = ssub.s32 %s8, %s15
    %p64 = scmp.eq.s32.totalorder %s63, 0
    %s66 = sadd.s32 %s65, 1
    %s67 = scalar_select %p64, %s65, %s66
    %p70 = pneg %p64
    %p71 = scmp.eq.s32.totalorder %s8, 1
    %p72 = por %p70, %p71
    %p73 = scmp.ne.s32.totalorder %s65, %s68
    %p74 = scmp.eq.s32.totalorder %s8, 0
    %p75 = por %p73, %p74
    %p76 = scmp.ne.s32.totalorder %s65, %s68
    %p77 = scmp.eq.s32.totalorder %s13, 1
    %p78 = por %p76, %p77
    %p79 = scmp.ne.s32.totalorder %s68, %s69
    %p80 = scmp.eq.s32.totalorder %s13, 0
    %p81 = por %p79, %p80
    %p82 = scmp.ne.s32.totalorder %s68, %s69
    %p83 = scmp.eq.s32.totalorder %s14, 1
    %p84 = por %p82, %p83
    %p86 = scmp.ne.s32.totalorder %s69, %s85
    %p87 = scmp.eq.s32.totalorder %s14, 0
    %p88 = por %p86, %p87
    %p89 = scmp.le.s32.totalorder 1, %s8
    %p90 = scmp.lt.s32.totalorder %s8, 3
    %p91 = pnand %p89, %p90
    %p92 = pneg %p91
    // Predicated region
    $region9: #{conv2d_1x1.1} parent=5 // pred_check
      _
    $region10: #{conv2d_1x1.1} parent=5 // pred_check_branch
      %94 = sbr.rel (%p91) target = $region12
    $region11: #{conv2d_1x1.1} parent=5 // pred_region
      %s95 = ssub.s32 %s8, 1
      // Predicated region
      $region13: #{conv2d_1x1.1} parent=11 // pred_check
        %p96 = pneg %p55
      $region14: #{conv2d_1x1.1} parent=11 // pred_check_branch
        %98 = sbr.rel (%p96) target = $region16
      $region15: #{conv2d_1x1.1} parent=11 // pred_region
        _
      $region16: #{conv2d_1x1.1} parent=11 // pred_fallthru
        _
    $region12: #{conv2d_1x1.1} parent=5 // pred_fallthru
      _
    %p99 = scmp.lt.s32.totalorder %s8, 2
    // Predicated region
    $region17: #{conv2d_1x1.1} parent=5 // pred_check
      %p100 = pneg %p99
    $region18: #{conv2d_1x1.1} parent=5 // pred_check_branch
      %102 = sbr.rel (%p100) target = $region20
    $region19: #{conv2d_1x1.1} parent=5 // pred_region
      // Predicated region
      $region21: #{conv2d_1x1.1} parent=19 // pred_check
        %p103 = pneg %p28
      $region22: #{conv2d_1x1.1} parent=19 // pred_check_branch
        %105 = sbr.rel (%p103) target = $region24
      $region23: #{conv2d_1x1.1} parent=19 // pred_region
        %s106 = smul.u32 10, %s8
        %p107 = scmp.lt.s32.totalorder %s106, 19
        %s108 = scalar_select %p107, %s106, 19
        %s109 = smul.addr %s108, 8
        %s110 = smul.addr %s109, 4
        %s111 = scalar_lea.vmem %s0, %s110
        %s112 = smul.u32 10, %s8
      $region24: #{conv2d_1x1.1} parent=19 // pred_fallthru
        _
    $region20: #{conv2d_1x1.1} parent=5 // pred_fallthru
      _
    %p113 = scmp.le.s32.totalorder 1, %s8
    %p114 = scmp.lt.s32.totalorder %s8, 3
    %p115 = pnand %p113, %p114
    %p116 = pneg %p115
    // Predicated region
    $region25: #{conv2d_1x1.1} parent=5 // pred_check
      _
    $region26: #{conv2d_1x1.1} parent=5 // pred_check_branch
      %118 = sbr.rel (%p115) target = $region28
    $region27: #{conv2d_1x1.1} parent=5 // pred_region
      %s119 = ssub.s32 %s8, 1
      %s120 = smul.u32 10, %s13
      %p121 = scmp.lt.s32.totalorder %s120, 19
      %s122 = scalar_select %p121, %s120, 19
      %s123 = smul.addr %s122, 8
      %s124 = smul.addr %s123, 4
      %s125 = scalar_lea.vmem %s0, %s124
      %p126 = pneg %p34
      %p127 = pneg %p31
      %p128 = pneg %p55
      %p129 = pneg %p52
      %p130 = pneg %p81
      %p131 = pneg %p78
      %s132 = smul.u32 10, %s13
      %p133 = scmp.lt.s32.totalorder %s132, 19
      %s134 = scalar_select %p133, %s132, 19
      %s135 = smul.addr %s134, 2
      %s136 = smul.addr %s135, 8
      %s137 = scalar_lea.vmem %s2, %s136
      %s138 = smul.u32 10, %s13
      %p139 = scmp.lt.s32.totalorder %s138, 19
      %s140 = scalar_select %p139, %s138, 19
      %s141 = smul.addr %s140, 8
      %s142 = smul.addr %s141, 4
      %s143 = scalar_lea.vmem %s0, %s142
      %s144 = smul.u32 10, %s13
      %s145 = smul.u32 10, %s13
      %p146 = scmp.lt.s32.totalorder %s145, 19
      %s147 = scalar_select %p146, %s145, 19
      %s148 = smul.addr %s147, 2
      %s149 = smul.addr %s148, 8
      %s150 = scalar_lea.vmem %s2, %s149
      %s151 = smul.u32 10, %s13
      %v153 = vld [vmem:[%s143] sm:$0xff]
      %v154 = vld [vmem:[%s143 + $0x8] sm:$0xff]
      %v155 = vld [vmem:[%s143 + $0x10] sm:$0xff]
      %v156 = vld [vmem:[%s143 + $0x18] sm:$0xff]
      %v157 = vld [vmem:[%s143 + $0x20] sm:$0xff]
      %v158 = vld [vmem:[%s143 + $0x28] sm:$0xff]
      %v159 = vld [vmem:[%s143 + $0x30] sm:$0xff]
      %v160 = vld [vmem:[%s143 + $0x38] sm:$0xff]
      %v161 = vld [vmem:[%s143 + $0x40] sm:$0xff]
      %v162 = vld [vmem:[%s143 + $0x48] sm:$0xff]
      %v163 = vld [vmem:[%s143 + $0x50] sm:$0xff]
      %v164 = vld [vmem:[%s143 + $0x58] sm:$0xff]
      %v165 = vld [vmem:[%s143 + $0x60] sm:$0xff]
      %v166 = vld [vmem:[%s143 + $0x68] sm:$0xff]
      %v167 = vld [vmem:[%s143 + $0x70] sm:$0xff]
      %v168 = vld [vmem:[%s143 + $0x78] sm:$0xff]
      %v169 = vld [vmem:[%s143 + $0x80] sm:$0xff]
      %v170 = vld [vmem:[%s143 + $0x88] sm:$0xff]
      %v171 = vld [vmem:[%s143 + $0x90] sm:$0xff]
      %v172 = vld [vmem:[%s143 + $0x98] sm:$0xff]
      %v173 = vld [vmem:[%s143 + $0xa0] sm:$0xff]
      %v174 = vld [vmem:[%s143 + $0xa8] sm:$0xff]
      %v175 = vld [vmem:[%s143 + $0xb0] sm:$0xff]
      %v176 = vld [vmem:[%s143 + $0xb8] sm:$0xff]
      %v177 = vld [vmem:[%s143 + $0xc0] sm:$0xff]
      %v178 = vld [vmem:[%s143 + $0xc8] sm:$0xff]
      %v179 = vld [vmem:[%s143 + $0xd0] sm:$0xff]
      %v180 = vld [vmem:[%s143 + $0xd8] sm:$0xff]
      %v181 = vld [vmem:[%s143 + $0xe0] sm:$0xff]
      %v182 = vld [vmem:[%s143 + $0xe8] sm:$0xff]
      %v183 = vld [vmem:[%s143 + $0xf0] sm:$0xff]
      %v184 = vld [vmem:[%s143 + $0xf8] sm:$0xff]
      %v185 = vld [vmem:[%s143 + $0x100] sm:$0xff]
      %v186 = vld [vmem:[%s143 + $0x108] sm:$0xff]
      %v187 = vld [vmem:[%s143 + $0x110] sm:$0xff]
      %v188 = vld [vmem:[%s143 + $0x118] sm:$0xff]
      %v189 = vld [vmem:[%s143 + $0x120] sm:$0xff]
      %v190 = vld [vmem:[%s143 + $0x128] sm:$0xff]
      %v191 = vld [vmem:[%s143 + $0x130] sm:$0xff]
      %v192 = vld [vmem:[%s143 + $0x138] sm:$0xff]
      %v193 = vld [vmem:[%s1] sm:$0xff]
      %v194 = vld [vmem:[%s1 + $0x8] sm:$0xff]
      %v195 = vld [vmem:[%s1 + $0x10] sm:$0xff]
      %v196 = vld [vmem:[%s1 + $0x18] sm:$0xff]
      %v197 = vld [vmem:[%s1 + $0x20] sm:$0xff]
      %v198 = vld [vmem:[%s1 + $0x28] sm:$0xff]
      %v199 = vld [vmem:[%s1 + $0x30] sm:$0xff]
      %v200 = vld [vmem:[%s1 + $0x38] sm:$0xff]
      %v201 = vld [vmem:[%s1 + $0x40] sm:$0xff]
      %v202 = vld [vmem:[%s1 + $0x48] sm:$0xff]
      %v203 = vld [vmem:[%s1 + $0x50] sm:$0xff]
      %v204 = vld [vmem:[%s1 + $0x58] sm:$0xff]
      %v205 = vld [vmem:[%s1 + $0x60] sm:$0xff]
      %v206 = vld [vmem:[%s1 + $0x68] sm:$0xff]
      %v207 = vld [vmem:[%s1 + $0x70] sm:$0xff]
      %v208 = vld [vmem:[%s1 + $0x78] sm:$0xff]
      %v209 = vld [vmem:[%s1 + $0x80] sm:$0xff]
      %v210 = vld [vmem:[%s1 + $0x88] sm:$0xff]
      %v211 = vld [vmem:[%s1 + $0x90] sm:$0xff]
      %v212 = vld [vmem:[%s1 + $0x98] sm:$0xff]
      %v213 = vld [vmem:[%s1 + $0xa0] sm:$0xff]
      %v214 = vld [vmem:[%s1 + $0xa8] sm:$0xff]
      %v215 = vld [vmem:[%s1 + $0xb0] sm:$0xff]
      %v216 = vld [vmem:[%s1 + $0xb8] sm:$0xff]
      %v217 = vld [vmem:[%s1 + $0xc0] sm:$0xff]
      %v218 = vld [vmem:[%s1 + $0xc8] sm:$0xff]
      %v219 = vld [vmem:[%s1 + $0xd0] sm:$0xff]
      %v220 = vld [vmem:[%s1 + $0xd8] sm:$0xff]
      %v221 = vld [vmem:[%s1 + $0xe0] sm:$0xff]
      %v222 = vld [vmem:[%s1 + $0xe8] sm:$0xff]
      %v223 = vld [vmem:[%s1 + $0xf0] sm:$0xff]
      %v224 = vld [vmem:[%s1 + $0xf8] sm:$0xff]
      %v225 = vld [vmem:[%s1 + $0x100] sm:$0xff]
      %v226 = vld [vmem:[%s1 + $0x108] sm:$0xff]
      %v227 = vld [vmem:[%s1 + $0x110] sm:$0xff]
      %v228 = vld [vmem:[%s1 + $0x118] sm:$0xff]
      %v229 = vld [vmem:[%s1 + $0x120] sm:$0xff]
      %v230 = vld [vmem:[%s1 + $0x128] sm:$0xff]
      %v231 = vld [vmem:[%s1 + $0x130] sm:$0xff]
      %v232 = vld [vmem:[%s1 + $0x138] sm:$0xff]
      %v233 = vld [vmem:[%s1 + $0x140] sm:$0xff]
      %v234 = vld [vmem:[%s1 + $0x148] sm:$0xff]
      %v235 = vld [vmem:[%s1 + $0x150] sm:$0xff]
      %v236 = vld [vmem:[%s1 + $0x158] sm:$0xff]
      %v237 = vld [vmem:[%s1 + $0x160] sm:$0xff]
      %v238 = vld [vmem:[%s1 + $0x168] sm:$0xff]
      %v239 = vld [vmem:[%s1 + $0x170] sm:$0xff]
      %v240 = vld [vmem:[%s1 + $0x178] sm:$0xff]
      %v241 = vld [vmem:[%s1 + $0x180] sm:$0xff]
      %v242 = vld [vmem:[%s1 + $0x188] sm:$0xff]
      %v243 = vld [vmem:[%s1 + $0x190] sm:$0xff]
      %v244 = vld [vmem:[%s1 + $0x198] sm:$0xff]
      %v245 = vld [vmem:[%s1 + $0x1a0] sm:$0xff]
      %v246 = vld [vmem:[%s1 + $0x1a8] sm:$0xff]
      %v247 = vld [vmem:[%s1 + $0x1b0] sm:$0xff]
      %v248 = vld [vmem:[%s1 + $0x1b8] sm:$0xff]
      %v249 = vld [vmem:[%s1 + $0x1c0] sm:$0xff]
      %v250 = vld [vmem:[%s1 + $0x1c8] sm:$0xff]
      %v251 = vld [vmem:[%s1 + $0x1d0] sm:$0xff]
      %v252 = vld [vmem:[%s1 + $0x1d8] sm:$0xff]
      %v253 = vld [vmem:[%s1 + $0x1e0] sm:$0xff]
      %v254 = vld [vmem:[%s1 + $0x1e8] sm:$0xff]
      %v255 = vld [vmem:[%s1 + $0x1f0] sm:$0xff]
      %v256 = vld [vmem:[%s1 + $0x1f8] sm:$0xff]
      %v257 = vld [vmem:[%s1 + $0x200] sm:$0xff]
      %v258 = vld [vmem:[%s1 + $0x208] sm:$0xff]
      %v259 = vld [vmem:[%s1 + $0x210] sm:$0xff]
      %v260 = vld [vmem:[%s1 + $0x218] sm:$0xff]
      %v261 = vld [vmem:[%s1 + $0x220] sm:$0xff]
      %v262 = vld [vmem:[%s1 + $0x228] sm:$0xff]
      %v263 = vld [vmem:[%s1 + $0x230] sm:$0xff]
      %v264 = vld [vmem:[%s1 + $0x238] sm:$0xff]
      %v265 = vld [vmem:[%s1 + $0x240] sm:$0xff]
      %v266 = vld [vmem:[%s1 + $0x248] sm:$0xff]
      %v267 = vld [vmem:[%s1 + $0x250] sm:$0xff]
      %v268 = vld [vmem:[%s1 + $0x258] sm:$0xff]
      %v269 = vld [vmem:[%s1 + $0x260] sm:$0xff]
      %v270 = vld [vmem:[%s1 + $0x268] sm:$0xff]
      %v271 = vld [vmem:[%s1 + $0x270] sm:$0xff]
      %v272 = vld [vmem:[%s1 + $0x278] sm:$0xff]
      %v273 = vld [vmem:[%s1 + $0x280] sm:$0xff]
      %v274 = vld [vmem:[%s1 + $0x288] sm:$0xff]
      %v275 = vld [vmem:[%s1 + $0x290] sm:$0xff]
      %v276 = vld [vmem:[%s1 + $0x298] sm:$0xff]
      %v277 = vld [vmem:[%s1 + $0x2a0] sm:$0xff]
      %v278 = vld [vmem:[%s1 + $0x2a8] sm:$0xff]
      %v279 = vld [vmem:[%s1 + $0x2b0] sm:$0xff]
      %v280 = vld [vmem:[%s1 + $0x2b8] sm:$0xff]
      %v281 = vld [vmem:[%s1 + $0x2c0] sm:$0xff]
      %v282 = vld [vmem:[%s1 + $0x2c8] sm:$0xff]
      %v283 = vld [vmem:[%s1 + $0x2d0] sm:$0xff]
      %v284 = vld [vmem:[%s1 + $0x2d8] sm:$0xff]
      %v285 = vld [vmem:[%s1 + $0x2e0] sm:$0xff]
      %v286 = vld [vmem:[%s1 + $0x2e8] sm:$0xff]
      %v287 = vld [vmem:[%s1 + $0x2f0] sm:$0xff]
      %v288 = vld [vmem:[%s1 + $0x2f8] sm:$0xff]
      %v289 = vld [vmem:[%s1 + $0x300] sm:$0xff]
      %v290 = vld [vmem:[%s1 + $0x308] sm:$0xff]
      %v291 = vld [vmem:[%s1 + $0x310] sm:$0xff]
      %v292 = vld [vmem:[%s1 + $0x318] sm:$0xff]
      %v293 = vld [vmem:[%s1 + $0x320] sm:$0xff]
      %v294 = vld [vmem:[%s1 + $0x328] sm:$0xff]
      %v295 = vld [vmem:[%s1 + $0x330] sm:$0xff]
      %v296 = vld [vmem:[%s1 + $0x338] sm:$0xff]
      %v297 = vld [vmem:[%s1 + $0x340] sm:$0xff]
      %v298 = vld [vmem:[%s1 + $0x348] sm:$0xff]
      %v299 = vld [vmem:[%s1 + $0x350] sm:$0xff]
      %v300 = vld [vmem:[%s1 + $0x358] sm:$0xff]
      %v301 = vld [vmem:[%s1 + $0x360] sm:$0xff]
      %v302 = vld [vmem:[%s1 + $0x368] sm:$0xff]
      %v303 = vld [vmem:[%s1 + $0x370] sm:$0xff]
      %v304 = vld [vmem:[%s1 + $0x378] sm:$0xff]
      %v305 = vld [vmem:[%s1 + $0x380] sm:$0xff]
      %v306 = vld [vmem:[%s1 + $0x388] sm:$0xff]
      %v307 = vld [vmem:[%s1 + $0x390] sm:$0xff]
      %v308 = vld [vmem:[%s1 + $0x398] sm:$0xff]
      %v309 = vld [vmem:[%s1 + $0x3a0] sm:$0xff]
      %v310 = vld [vmem:[%s1 + $0x3a8] sm:$0xff]
      %v311 = vld [vmem:[%s1 + $0x3b0] sm:$0xff]
      %v312 = vld [vmem:[%s1 + $0x3b8] sm:$0xff]
      %v353 = vunpack.c.l.b16 %v153
      %v354 = vunpack.c.h.b16 %v153
      %v355 = vunpack.c.l.b16 %v154
      %v356 = vunpack.c.h.b16 %v154
      %v357 = vunpack.c.l.b16 %v155
      %v358 = vunpack.c.h.b16 %v155
      %v359 = vunpack.c.l.b16 %v156
      %v360 = vunpack.c.h.b16 %v156
      %v361 = vunpack.c.l.b16 %v157
      %v362 = vunpack.c.h.b16 %v157
      %v363 = vunpack.c.l.b16 %v158
      %v364 = vunpack.c.h.b16 %v158
      %v365 = vunpack.c.l.b16 %v159
      %v366 = vunpack.c.h.b16 %v159
      %v367 = vunpack.c.l.b16 %v160
      %v368 = vunpack.c.h.b16 %v160
      %v369 = vunpack.c.l.b16 %v161
      %v370 = vunpack.c.h.b16 %v161
      %v371 = vunpack.c.l.b16 %v162
      %v372 = vunpack.c.h.b16 %v162
      %v373 = vunpack.c.l.b16 %v163
      %v374 = vunpack.c.h.b16 %v163
      %v375 = vunpack.c.l.b16 %v164
      %v376 = vunpack.c.h.b16 %v164
      %v377 = vunpack.c.l.b16 %v165
      %v378 = vunpack.c.h.b16 %v165
      %v379 = vunpack.c.l.b16 %v166
      %v380 = vunpack.c.h.b16 %v166
      %v381 = vunpack.c.l.b16 %v167
      %v382 = vunpack.c.h.b16 %v167
      %v383 = vunpack.c.l.b16 %v168
      %v384 = vunpack.c.h.b16 %v168
      %v385 = vunpack.c.l.b16 %v169
      %v386 = vunpack.c.h.b16 %v169
      %v387 = vunpack.c.l.b16 %v170
      %v388 = vunpack.c.h.b16 %v170
      %v389 = vunpack.c.l.b16 %v171
      %v390 = vunpack.c.h.b16 %v171
      %v391 = vunpack.c.l.b16 %v172
      %v392 = vunpack.c.h.b16 %v172
      %v393 = vunpack.c.l.b16 %v173
      %v394 = vunpack.c.h.b16 %v173
      %v395 = vunpack.c.l.b16 %v174
      %v396 = vunpack.c.h.b16 %v174
      %v397 = vunpack.c.l.b16 %v175
      %v398 = vunpack.c.h.b16 %v175
      %v399 = vunpack.c.l.b16 %v176
      %v400 = vunpack.c.h.b16 %v176
      %v401 = vunpack.c.l.b16 %v177
      %v402 = vunpack.c.h.b16 %v177
      %v403 = vunpack.c.l.b16 %v178
      %v404 = vunpack.c.h.b16 %v178
      %v405 = vunpack.c.l.b16 %v179
      %v406 = vunpack.c.h.b16 %v179
      %v407 = vunpack.c.l.b16 %v180
      %v408 = vunpack.c.h.b16 %v180
      %v409 = vunpack.c.l.b16 %v181
      %v410 = vunpack.c.h.b16 %v181
      %v411 = vunpack.c.l.b16 %v182
      %v412 = vunpack.c.h.b16 %v182
      %v413 = vunpack.c.l.b16 %v183
      %v414 = vunpack.c.h.b16 %v183
      %v415 = vunpack.c.l.b16 %v184
      %v416 = vunpack.c.h.b16 %v184
      %v417 = vunpack.c.l.b16 %v185
      %v418 = vunpack.c.h.b16 %v185
      %v419 = vunpack.c.l.b16 %v186
      %v420 = vunpack.c.h.b16 %v186
      %v421 = vunpack.c.l.b16 %v187
      %v422 = vunpack.c.h.b16 %v187
      %v423 = vunpack.c.l.b16 %v188
      %v424 = vunpack.c.h.b16 %v188
      %v425 = vunpack.c.l.b16 %v189
      %v426 = vunpack.c.h.b16 %v189
      %v427 = vunpack.c.l.b16 %v190
      %v428 = vunpack.c.h.b16 %v190
      %v429 = vunpack.c.l.b16 %v191
      %v430 = vunpack.c.h.b16 %v191
      %v431 = vunpack.c.l.b16 %v192
      %v432 = vunpack.c.h.b16 %v192
      %v433 = vpack.c.b16 %v361, %v353
      %v434 = vpack.c.b16 %v362, %v354
      %v435 = vpack.c.b16 %v363, %v355
      %v436 = vpack.c.b16 %v364, %v356
      %v437 = vpack.c.b16 %v365, %v357
      %v438 = vpack.c.b16 %v366, %v358
      %v439 = vpack.c.b16 %v367, %v359
      %v440 = vpack.c.b16 %v368, %v360
      %v441 = vpack.c.b16 %v377, %v369
      %v442 = vpack.c.b16 %v378, %v370
      %v443 = vpack.c.b16 %v379, %v371
      %v444 = vpack.c.b16 %v380, %v372
      %v445 = vpack.c.b16 %v381, %v373
      %v446 = vpack.c.b16 %v382, %v374
      %v447 = vpack.c.b16 %v383, %v375
      %v448 = vpack.c.b16 %v384, %v376
      %v449 = vpack.c.b16 %v393, %v385
      %v450 = vpack.c.b16 %v394, %v386
      %v451 = vpack.c.b16 %v395, %v387
      %v452 = vpack.c.b16 %v396, %v388
      %v453 = vpack.c.b16 %v397, %v389
      %v454 = vpack.c.b16 %v398, %v390
      %v455 = vpack.c.b16 %v399, %v391
      %v456 = vpack.c.b16 %v400, %v392
      %v457 = vpack.c.b16 %v409, %v401
      %v458 = vpack.c.b16 %v410, %v402
      %v459 = vpack.c.b16 %v411, %v403
      %v460 = vpack.c.b16 %v412, %v404
      %v461 = vpack.c.b16 %v413, %v405
      %v462 = vpack.c.b16 %v414, %v406
      %v463 = vpack.c.b16 %v415, %v407
      %v464 = vpack.c.b16 %v416, %v408
      %v465 = vpack.c.b16 %v425, %v417
      %v466 = vpack.c.b16 %v426, %v418
      %v467 = vpack.c.b16 %v427, %v419
      %v468 = vpack.c.b16 %v428, %v420
      %v469 = vpack.c.b16 %v429, %v421
      %v470 = vpack.c.b16 %v430, %v422
      %v471 = vpack.c.b16 %v431, %v423
      %v472 = vpack.c.b16 %v432, %v424
      %v628 = vunpack.c.l.b16 %v193
      %v629 = vunpack.c.h.b16 %v193
      %v630 = vunpack.c.l.b16 %v194
      %v631 = vunpack.c.h.b16 %v194
      %v632 = vunpack.c.l.b16 %v195
      %v633 = vunpack.c.h.b16 %v195
      %v634 = vunpack.c.l.b16 %v196
      %v635 = vunpack.c.h.b16 %v196
      %v636 = vunpack.c.l.b16 %v197
      %v637 = vunpack.c.h.b16 %v197
      %v638 = vunpack.c.l.b16 %v198
      %v639 = vunpack.c.h.b16 %v198
      %v640 = vunpack.c.l.b16 %v199
      %v641 = vunpack.c.h.b16 %v199
      %v642 = vunpack.c.l.b16 %v200
      %v643 = vunpack.c.h.b16 %v200
      %v644 = vunpack.c.l.b16 %v201
      %v645 = vunpack.c.h.b16 %v201
      %v646 = vunpack.c.l.b16 %v202
      %v647 = vunpack.c.h.b16 %v202
      %v648 = vunpack.c.l.b16 %v203
      %v649 = vunpack.c.h.b16 %v203
      %v650 = vunpack.c.l.b16 %v204
      %v651 = vunpack.c.h.b16 %v204
      %v652 = vunpack.c.l.b16 %v205
      %v653 = vunpack.c.h.b16 %v205
      %v654 = vunpack.c.l.b16 %v206
      %v655 = vunpack.c.h.b16 %v206
      %v656 = vunpack.c.l.b16 %v207
      %v657 = vunpack.c.h.b16 %v207
      %v658 = vunpack.c.l.b16 %v208
      %v659 = vunpack.c.h.b16 %v208
      %v660 = vunpack.c.l.b16 %v209
      %v661 = vunpack.c.h.b16 %v209
      %v662 = vunpack.c.l.b16 %v210
      %v663 = vunpack.c.h.b16 %v210
      %v664 = vunpack.c.l.b16 %v211
      %v665 = vunpack.c.h.b16 %v211
      %v666 = vunpack.c.l.b16 %v212
      %v667 = vunpack.c.h.b16 %v212
      %v668 = vunpack.c.l.b16 %v213
      %v669 = vunpack.c.h.b16 %v213
      %v670 = vunpack.c.l.b16 %v214
      %v671 = vunpack.c.h.b16 %v214
      %v672 = vunpack.c.l.b16 %v215
      %v673 = vunpack.c.h.b16 %v215
      %v674 = vunpack.c.l.b16 %v216
      %v675 = vunpack.c.h.b16 %v216
      %v676 = vunpack.c.l.b16 %v217
      %v677 = vunpack.c.h.b16 %v217
      %v678 = vunpack.c.l.b16 %v218
      %v679 = vunpack.c.h.b16 %v218
      %v680 = vunpack.c.l.b16 %v219
      %v681 = vunpack.c.h.b16 %v219
      %v682 = vunpack.c.l.b16 %v220
      %v683 = vunpack.c.h.b16 %v220
      %v684 = vunpack.c.l.b16 %v221
      %v685 = vunpack.c.h.b16 %v221
      %v686 = vunpack.c.l.b16 %v222
      %v687 = vunpack.c.h.b16 %v222
      %v688 = vunpack.c.l.b16 %v223
      %v689 = vunpack.c.h.b16 %v223
      %v690 = vunpack.c.l.b16 %v224
      %v691 = vunpack.c.h.b16 %v224
      %v692 = vunpack.c.l.b16 %v225
      %v693 = vunpack.c.h.b16 %v225
      %v694 = vunpack.c.l.b16 %v226
      %v695 = vunpack.c.h.b16 %v226
      %v696 = vunpack.c.l.b16 %v227
      %v697 = vunpack.c.h.b16 %v227
      %v698 = vunpack.c.l.b16 %v228
      %v699 = vunpack.c.h.b16 %v228
      %v700 = vunpack.c.l.b16 %v229
      %v701 = vunpack.c.h.b16 %v229
      %v702 = vunpack.c.l.b16 %v230
      %v703 = vunpack.c.h.b16 %v230
      %v704 = vunpack.c.l.b16 %v231
      %v705 = vunpack.c.h.b16 %v231
      %v706 = vunpack.c.l.b16 %v232
      %v707 = vunpack.c.h.b16 %v232
      %v708 = vunpack.c.l.b16 %v233
      %v709 = vunpack.c.h.b16 %v233
      %v710 = vunpack.c.l.b16 %v234
      %v711 = vunpack.c.h.b16 %v234
      %v712 = vunpack.c.l.b16 %v235
      %v713 = vunpack.c.h.b16 %v235
      %v714 = vunpack.c.l.b16 %v236
      %v715 = vunpack.c.h.b16 %v236
      %v716 = vunpack.c.l.b16 %v237
      %v717 = vunpack.c.h.b16 %v237
      %v718 = vunpack.c.l.b16 %v238
      %v719 = vunpack.c.h.b16 %v238
      %v720 = vunpack.c.l.b16 %v239
      %v721 = vunpack.c.h.b16 %v239
      %v722 = vunpack.c.l.b16 %v240
      %v723 = vunpack.c.h.b16 %v240
      %v724 = vunpack.c.l.b16 %v241
      %v725 = vunpack.c.h.b16 %v241
      %v726 = vunpack.c.l.b16 %v242
      %v727 = vunpack.c.h.b16 %v242
      %v728 = vunpack.c.l.b16 %v243
      %v729 = vunpack.c.h.b16 %v243
      %v730 = vunpack.c.l.b16 %v244
      %v731 = vunpack.c.h.b16 %v244
      %v732 = vunpack.c.l.b16 %v245
      %v733 = vunpack.c.h.b16 %v245
      %v734 = vunpack.c.l.b16 %v246
      %v735 = vunpack.c.h.b16 %v246
      %v736 = vunpack.c.l.b16 %v247
      %v737 = vunpack.c.h.b16 %v247
      %v738 = vunpack.c.l.b16 %v248
      %v739 = vunpack.c.h.b16 %v248
      %v740 = vunpack.c.l.b16 %v249
      %v741 = vunpack.c.h.b16 %v249
      %v742 = vunpack.c.l.b16 %v250
      %v743 = vunpack.c.h.b16 %v250
      %v744 = vunpack.c.l.b16 %v251
      %v745 = vunpack.c.h.b16 %v251
      %v746 = vunpack.c.l.b16 %v252
      %v747 = vunpack.c.h.b16 %v252
      %v748 = vunpack.c.l.b16 %v253
      %v749 = vunpack.c.h.b16 %v253
      %v750 = vunpack.c.l.b16 %v254
      %v751 = vunpack.c.h.b16 %v254
      %v752 = vunpack.c.l.b16 %v255
      %v753 = vunpack.c.h.b16 %v255
      %v754 = vunpack.c.l.b16 %v256
      %v755 = vunpack.c.h.b16 %v256
      %v756 = vunpack.c.l.b16 %v257
      %v757 = vunpack.c.h.b16 %v257
      %v758 = vunpack.c.l.b16 %v258
      %v759 = vunpack.c.h.b16 %v258
      %v760 = vunpack.c.l.b16 %v259
      %v761 = vunpack.c.h.b16 %v259
      %v762 = vunpack.c.l.b16 %v260
      %v763 = vunpack.c.h.b16 %v260
      %v764 = vunpack.c.l.b16 %v261
      %v765 = vunpack.c.h.b16 %v261
      %v766 = vunpack.c.l.b16 %v262
      %v767 = vunpack.c.h.b16 %v262
      %v768 = vunpack.c.l.b16 %v263
      %v769 = vunpack.c.h.b16 %v263
      %v770 = vunpack.c.l.b16 %v264
      %v771 = vunpack.c.h.b16 %v264
      %v772 = vunpack.c.l.b16 %v265
      %v773 = vunpack.c.h.b16 %v265
      %v774 = vunpack.c.l.b16 %v266
      %v775 = vunpack.c.h.b16 %v266
      %v776 = vunpack.c.l.b16 %v267
      %v777 = vunpack.c.h.b16 %v267
      %v778 = vunpack.c.l.b16 %v268
      %v779 = vunpack.c.h.b16 %v268
      %v780 = vunpack.c.l.b16 %v269
      %v781 = vunpack.c.h.b16 %v269
      %v782 = vunpack.c.l.b16 %v270
      %v783 = vunpack.c.h.b16 %v270
      %v784 = vunpack.c.l.b16 %v271
      %v785 = vunpack.c.h.b16 %v271
      %v786 = vunpack.c.l.b16 %v272
      %v787 = vunpack.c.h.b16 %v272
      %v788 = vunpack.c.l.b16 %v273
      %v789 = vunpack.c.h.b16 %v273
      %v790 = vunpack.c.l.b16 %v274
      %v791 = vunpack.c.h.b16 %v274
      %v792 = vunpack.c.l.b16 %v275
      %v793 = vunpack.c.h.b16 %v275
      %v794 = vunpack.c.l.b16 %v276
      %v795 = vunpack.c.h.b16 %v276
      %v796 = vunpack.c.l.b16 %v277
      %v797 = vunpack.c.h.b16 %v277
      %v798 = vunpack.c.l.b16 %v278
      %v799 = vunpack.c.h.b16 %v278
      %v800 = vunpack.c.l.b16 %v279
      %v801 = vunpack.c.h.b16 %v279
      %v802 = vunpack.c.l.b16 %v280
      %v803 = vunpack.c.h.b16 %v280
      %v804 = vunpack.c.l.b16 %v281
      %v805 = vunpack.c.h.b16 %v281
      %v806 = vunpack.c.l.b16 %v282
      %v807 = vunpack.c.h.b16 %v282
      %v808 = vunpack.c.l.b16 %v283
      %v809 = vunpack.c.h.b16 %v283
      %v810 = vunpack.c.l.b16 %v284
      %v811 = vunpack.c.h.b16 %v284
      %v812 = vunpack.c.l.b16 %v285
      %v813 = vunpack.c.h.b16 %v285
      %v814 = vunpack.c.l.b16 %v286
      %v815 = vunpack.c.h.b16 %v286
      %v816 = vunpack.c.l.b16 %v287
      %v817 = vunpack.c.h.b16 %v287
      %v818 = vunpack.c.l.b16 %v288
      %v819 = vunpack.c.h.b16 %v288
      %v820 = vunpack.c.l.b16 %v289
      %v821 = vunpack.c.h.b16 %v289
      %v822 = vunpack.c.l.b16 %v290
      %v823 = vunpack.c.h.b16 %v290
      %v824 = vunpack.c.l.b16 %v291
      %v825 = vunpack.c.h.b16 %v291
      %v826 = vunpack.c.l.b16 %v292
      %v827 = vunpack.c.h.b16 %v292
      %v828 = vunpack.c.l.b16 %v293
      %v829 = vunpack.c.h.b16 %v293
      %v830 = vunpack.c.l.b16 %v294
      %v831 = vunpack.c.h.b16 %v294
      %v832 = vunpack.c.l.b16 %v295
      %v833 = vunpack.c.h.b16 %v295
      %v834 = vunpack.c.l.b16 %v296
      %v835 = vunpack.c.h.b16 %v296
      %v836 = vunpack.c.l.b16 %v297
      %v837 = vunpack.c.h.b16 %v297
      %v838 = vunpack.c.l.b16 %v298
      %v839 = vunpack.c.h.b16 %v298
      %v840 = vunpack.c.l.b16 %v299
      %v841 = vunpack.c.h.b16 %v299
      %v842 = vunpack.c.l.b16 %v300
      %v843 = vunpack.c.h.b16 %v300
      %v844 = vunpack.c.l.b16 %v301
      %v845 = vunpack.c.h.b16 %v301
      %v846 = vunpack.c.l.b16 %v302
      %v847 = vunpack.c.h.b16 %v302
      %v848 = vunpack.c.l.b16 %v303
      %v849 = vunpack.c.h.b16 %v303
      %v850 = vunpack.c.l.b16 %v304
      %v851 = vunpack.c.h.b16 %v304
      %v852 = vunpack.c.l.b16 %v305
      %v853 = vunpack.c.h.b16 %v305
      %v854 = vunpack.c.l.b16 %v306
      %v855 = vunpack.c.h.b16 %v306
      %v856 = vunpack.c.l.b16 %v307
      %v857 = vunpack.c.h.b16 %v307
      %v858 = vunpack.c.l.b16 %v308
      %v859 = vunpack.c.h.b16 %v308
      %v860 = vunpack.c.l.b16 %v309
      %v861 = vunpack.c.h.b16 %v309
      %v862 = vunpack.c.l.b16 %v310
      %v863 = vunpack.c.h.b16 %v310
      %v864 = vunpack.c.l.b16 %v311
      %v865 = vunpack.c.h.b16 %v311
      %v866 = vunpack.c.l.b16 %v312
      %v867 = vunpack.c.h.b16 %v312
      %v868 = vpack.c.b16 %v630, %v628
      %v869 = vpack.c.b16 %v631, %v629
      %v870 = vpack.c.b16 %v634, %v632
      %v871 = vpack.c.b16 %v635, %v633
      %v872 = vpack.c.b16 %v638, %v636
      %v873 = vpack.c.b16 %v639, %v637
      %v874 = vpack.c.b16 %v642, %v640
      %v875 = vpack.c.b16 %v643, %v641
      %v876 = vpack.c.b16 %v646, %v644
      %v877 = vpack.c.b16 %v647, %v645
      %v878 = vpack.c.b16 %v650, %v648
      %v879 = vpack.c.b16 %v651, %v649
      %v880 = vpack.c.b16 %v654, %v652
      %v881 = vpack.c.b16 %v655, %v653
      %v882 = vpack.c.b16 %v658, %v656
      %v883 = vpack.c.b16 %v659, %v657
      %v884 = vpack.c.b16 %v662, %v660
      %v885 = vpack.c.b16 %v663, %v661
      %v886 = vpack.c.b16 %v666, %v664
      %v887 = vpack.c.b16 %v667, %v665
      %v888 = vpack.c.b16 %v670, %v668
      %v889 = vpack.c.b16 %v671, %v669
      %v890 = vpack.c.b16 %v674, %v672
      %v891 = vpack.c.b16 %v675, %v673
      %v892 = vpack.c.b16 %v678, %v676
      %v893 = vpack.c.b16 %v679, %v677
      %v894 = vpack.c.b16 %v682, %v680
      %v895 = vpack.c.b16 %v683, %v681
      %v896 = vpack.c.b16 %v686, %v684
      %v897 = vpack.c.b16 %v687, %v685
      %v898 = vpack.c.b16 %v690, %v688
      %v899 = vpack.c.b16 %v691, %v689
      %v900 = vpack.c.b16 %v694, %v692
      %v901 = vpack.c.b16 %v695, %v693
      %v902 = vpack.c.b16 %v698, %v696
      %v903 = vpack.c.b16 %v699, %v697
      %v904 = vpack.c.b16 %v702, %v700
      %v905 = vpack.c.b16 %v703, %v701
      %v906 = vpack.c.b16 %v706, %v704
      %v907 = vpack.c.b16 %v707, %v705
      %v908 = vpack.c.b16 %v710, %v708
      %v909 = vpack.c.b16 %v711, %v709
      %v910 = vpack.c.b16 %v714, %v712
      %v911 = vpack.c.b16 %v715, %v713
      %v912 = vpack.c.b16 %v718, %v716
      %v913 = vpack.c.b16 %v719, %v717
      %v914 = vpack.c.b16 %v722, %v720
      %v915 = vpack.c.b16 %v723, %v721
      %v916 = vpack.c.b16 %v726, %v724
      %v917 = vpack.c.b16 %v727, %v725
      %v918 = vpack.c.b16 %v730, %v728
      %v919 = vpack.c.b16 %v731, %v729
      %v920 = vpack.c.b16 %v734, %v732
      %v921 = vpack.c.b16 %v735, %v733
      %v922 = vpack.c.b16 %v738, %v736
      %v923 = vpack.c.b16 %v739, %v737
      %v924 = vpack.c.b16 %v742, %v740
      %v925 = vpack.c.b16 %v743, %v741
      %v926 = vpack.c.b16 %v746, %v744
      %v927 = vpack.c.b16 %v747, %v745
      %v928 = vpack.c.b16 %v750, %v748
      %v929 = vpack.c.b16 %v751, %v749
      %v930 = vpack.c.b16 %v754, %v752
      %v931 = vpack.c.b16 %v755, %v753
      %v932 = vpack.c.b16 %v758, %v756
      %v933 = vpack.c.b16 %v759, %v757
      %v934 = vpack.c.b16 %v762, %v760
      %v935 = vpack.c.b16 %v763, %v761
      %v936 = vpack.c.b16 %v766, %v764
      %v937 = vpack.c.b16 %v767, %v765
      %v938 = vpack.c.b16 %v770, %v768
      %v939 = vpack.c.b16 %v771, %v769
      %v940 = vpack.c.b16 %v774, %v772
      %v941 = vpack.c.b16 %v775, %v773
      %v942 = vpack.c.b16 %v778, %v776
      %v943 = vpack.c.b16 %v779, %v777
      %v944 = vpack.c.b16 %v782, %v780
      %v945 = vpack.c.b16 %v783, %v781
      %v946 = vpack.c.b16 %v786, %v784
      %v947 = vpack.c.b16 %v787, %v785
      %v948 = vpack.c.b16 %v790, %v788
      %v949 = vpack.c.b16 %v791, %v789
      %v950 = vpack.c.b16 %v794, %v792
      %v951 = vpack.c.b16 %v795, %v793
      %v952 = vpack.c.b16 %v798, %v796
      %v953 = vpack.c.b16 %v799, %v797
      %v954 = vpack.c.b16 %v802, %v800
      %v955 = vpack.c.b16 %v803, %v801
      %v956 = vpack.c.b16 %v806, %v804
      %v957 = vpack.c.b16 %v807, %v805
      %v958 = vpack.c.b16 %v810, %v808
      %v959 = vpack.c.b16 %v811, %v809
      %v960 = vpack.c.b16 %v814, %v812
      %v961 = vpack.c.b16 %v815, %v813
      %v962 = vpack.c.b16 %v818, %v816
      %v963 = vpack.c.b16 %v819, %v817
      %v964 = vpack.c.b16 %v822, %v820
      %v965 = vpack.c.b16 %v823, %v821
      %v966 = vpack.c.b16 %v826, %v824
      %v967 = vpack.c.b16 %v827, %v825
      %v968 = vpack.c.b16 %v830, %v828
      %v969 = vpack.c.b16 %v831, %v829
      %v970 = vpack.c.b16 %v834, %v832
      %v971 = vpack.c.b16 %v835, %v833
      %v972 = vpack.c.b16 %v838, %v836
      %v973 = vpack.c.b16 %v839, %v837
      %v974 = vpack.c.b16 %v842, %v840
      %v975 = vpack.c.b16 %v843, %v841
      %v976 = vpack.c.b16 %v846, %v844
      %v977 = vpack.c.b16 %v847, %v845
      %v978 = vpack.c.b16 %v850, %v848
      %v979 = vpack.c.b16 %v851, %v849
      %v980 = vpack.c.b16 %v854, %v852
      %v981 = vpack.c.b16 %v855, %v853
      %v982 = vpack.c.b16 %v858, %v856
      %v983 = vpack.c.b16 %v859, %v857
      %v984 = vpack.c.b16 %v862, %v860
      %v985 = vpack.c.b16 %v863, %v861
      %v986 = vpack.c.b16 %v866, %v864
      %v987 = vpack.c.b16 %v867, %v865
      %vm1108 = vcmask 523264
      %v1110 = vsel %vm1108, %v440, 0
      %v1113 = vsel %vm1108, %v448, 0
      %v1116 = vsel %vm1108, %v456, 0
      %v1119 = vsel %vm1108, %v464, 0
      %v1122 = vsel %vm1108, %v472, 0
      %1124 = vmatprep.subr.bf16.mxu0 %v869
      %1125 = vmatpush1.bf16.msra.mxu0 %v868
      %1126 = vmatprep.subr.bf16.mxu0 %v871
      %1127 = vmatpush1.bf16.msra.mxu0 %v870
      %1128 = vmatprep.subr.bf16.mxu0 %v873
      %1129 = vmatpush1.bf16.msra.mxu0 %v872
      %1130 = vmatprep.subr.bf16.mxu0 %v875
      %1131 = vmatpush1.bf16.msra.mxu0 %v874
      %1132 = vmatprep.subr.bf16.mxu0 %v877
      %1133 = vmatpush1.bf16.msra.mxu0 %v876
      %1134 = vmatprep.subr.bf16.mxu0 %v879
      %1135 = vmatpush1.bf16.msra.mxu0 %v878
      %1136 = vmatprep.subr.bf16.mxu0 %v881
      %1137 = vmatpush1.bf16.msra.mxu0 %v880
      %1138 = vmatprep.subr.bf16.mxu0 %v883
      %1139 = vmatpush1.bf16.msra.mxu0 %v882
      %1140 = vmatprep.subr.bf16.mxu0 %v885
      %1141 = vmatpush1.bf16.msra.mxu0 %v884
      %1142 = vmatprep.subr.bf16.mxu0 %v887
      %1143 = vmatpush1.bf16.msra.mxu0 %v886
      %1144 = vmatprep.subr.bf16.mxu0 %v889
      %1145 = vmatpush1.bf16.msra.mxu0 %v888
      %1146 = vmatprep.subr.bf16.mxu0 %v891
      %1147 = vmatpush1.bf16.msra.mxu0 %v890
      %1148 = vmatprep.subr.bf16.mxu0 %v893
      %1149 = vmatpush1.bf16.msra.mxu0 %v892
      %1150 = vmatprep.subr.bf16.mxu0 %v895
      %1151 = vmatpush1.bf16.msra.mxu0 %v894
      %1152 = vmatprep.subr.bf16.mxu0 %v897
      %1153 = vmatpush1.bf16.msra.mxu0 %v896
      %1154 = vmatprep.subr.bf16.mxu0 %v899
      %1155 = vmatpush1.bf16.msra.mxu0 %v898
      %1156 = vmatprep.mubr.bf16.mxu0 %v434
      %1157 = vmatmul.mubr.bf16.gmra.mrb[0].mxu0 %v433
      %v1158 = vpop.f32.mrb[0].mxu0
      %v1159 = vadd.f32 0.0, %v1158
      %v1160 = vpop.f32.mrb[0].mxu0
      %v1161 = vadd.f32 0.0, %v1160
      %v1162 = vpop.f32.mrb[0].mxu0
      %v1163 = vadd.f32 0.0, %v1162
      %v1164 = vpop.f32.mrb[0].mxu0
      %v1165 = vadd.f32 0.0, %v1164
      %1166 = vmatprep.mubr.bf16.mxu0 %v442
      %1167 = vmatmul.mubr.bf16.gmra.mrb[0].mxu0 %v441
      %v1168 = vpop.f32.mrb[0].mxu0
      %v1169 = vadd.f32 0.0, %v1168
      %v1170 = vpop.f32.mrb[0].mxu0
      %v1171 = vadd.f32 0.0, %v1170
      %v1172 = vpop.f32.mrb[0].mxu0
      %v1173 = vadd.f32 0.0, %v1172
      %v1174 = vpop.f32.mrb[0].mxu0
      %v1175 = vadd.f32 0.0, %v1174
      %1176 = vmatprep.mubr.bf16.mxu0 %v450
      %1177 = vmatmul.mubr.bf16.gmra.mrb[0].mxu0 %v449
      %v1178 = vpop.f32.mrb[0].mxu0
      %v1179 = vadd.f32 0.0, %v1178
      %v1180 = vpop.f32.mrb[0].mxu0
      %v1181 = vadd.f32 0.0, %v1180
      %v1182 = vpop.f32.mrb[0].mxu0
      %v1183 = vadd.f32 0.0, %v1182
      %v1184 = vpop.f32.mrb[0].mxu0
      %v1185 = vadd.f32 0.0, %v1184
      %1186 = vmatprep.mubr.bf16.mxu0 %v458
      %1187 = vmatmul.mubr.bf16.gmra.mrb[0].mxu0 %v457
      %v1188 = vpop.f32.mrb[0].mxu0
      %v1189 = vadd.f32 0.0, %v1188
      %v1190 = vpop.f32.mrb[0].mxu0
      %v1191 = vadd.f32 0.0, %v1190
      %v1192 = vpop.f32.mrb[0].mxu0
      %v1193 = vadd.f32 0.0, %v1192
      %v1194 = vpop.f32.mrb[0].mxu0
      %v1195 = vadd.f32 0.0, %v1194
      %1196 = vmatprep.mubr.bf16.mxu0 %v466
      %1197 = vmatmul.mubr.bf16.gmra.mrb[0].mxu0 %v465
      %v1198 = vpop.f32.mrb[0].mxu0
      %v1199 = vadd.f32 0.0, %v1198
      %v1200 = vpop.f32.mrb[0].mxu0
      %v1201 = vadd.f32 0.0, %v1200
      %v1202 = vpop.f32.mrb[0].mxu0
      %v1203 = vadd.f32 0.0, %v1202
      %v1204 = vpop.f32.mrb[0].mxu0
      %v1205 = vadd.f32 0.0, %v1204
      %1206 = vdwg.mxu0
      %1207 = vmatprep.subr.bf16.mxu0 %v901
      %1208 = vmatpush1.bf16.msra.mxu0 %v900
      %1209 = vmatprep.subr.bf16.mxu0 %v903
      %1210 = vmatpush1.bf16.msra.mxu0 %v902
      %1211 = vmatprep.subr.bf16.mxu0 %v905
      %1212 = vmatpush1.bf16.msra.mxu0 %v904
      %1213 = vmatprep.subr.bf16.mxu0 %v907
      %1214 = vmatpush1.bf16.msra.mxu0 %v906
      %1215 = vmatprep.subr.bf16.mxu0 %v909
      %1216 = vmatpush1.bf16.msra.mxu0 %v908
      %1217 = vmatprep.subr.bf16.mxu0 %v911
      %1218 = vmatpush1.bf16.msra.mxu0 %v910
      %1219 = vmatprep.subr.bf16.mxu0 %v913
      %1220 = vmatpush1.bf16.msra.mxu0 %v912
      %1221 = vmatprep.subr.bf16.mxu0 %v915
      %1222 = vmatpush1.bf16.msra.mxu0 %v914
      %1223 = vmatprep.subr.bf16.mxu0 %v917
      %1224 = vmatpush1.bf16.msra.mxu0 %v916
      %1225 = vmatprep.subr.bf16.mxu0 %v919
      %1226 = vmatpush1.bf16.msra.mxu0 %v918
      %1227 = vmatprep.subr.bf16.mxu0 %v921
      %1228 = vmatpush1.bf16.msra.mxu0 %v920
      %1229 = vmatprep.subr.bf16.mxu0 %v923
      %1230 = vmatpush1.bf16.msra.mxu0 %v922
      %1231 = vmatprep.subr.bf16.mxu0 %v925
      %1232 = vmatpush1.bf16.msra.mxu0 %v924
      %1233 = vmatprep.subr.bf16.mxu0 %v927
      %1234 = vmatpush1.bf16.msra.mxu0 %v926
      %1235 = vmatprep.subr.bf16.mxu0 %v929
      %1236 = vmatpush1.bf16.msra.mxu0 %v928
      %1237 = vmatprep.subr.bf16.mxu0 %v931
      %1238 = vmatpush1.bf16.msra.mxu0 %v930
      %1239 = vmatprep.mubr.bf16.mxu0 %v436
      %1240 = vmatmul.mubr.bf16.gmra.mrb[0].mxu0 %v435
      %v1241 = vpop.f32.mrb[0].mxu0
      %v1242 = vadd.f32 %v1159, %v1241
      %v1243 = vpop.f32.mrb[0].mxu0
      %v1244 = vadd.f32 %v1161, %v1243
      %v1245 = vpop.f32.mrb[0].mxu0
      %v1246 = vadd.f32 %v1163, %v1245
      %v1247 = vpop.f32.mrb[0].mxu0
      %v1248 = vadd.f32 %v1165, %v1247
      %1249 = vmatprep.mubr.bf16.mxu0 %v444
      %1250 = vmatmul.mubr.bf16.gmra.mrb[0].mxu0 %v443
      %v1251 = vpop.f32.mrb[0].mxu0
      %v1252 = vadd.f32 %v1169, %v1251
      %v1253 = vpop.f32.mrb[0].mxu0
      %v1254 = vadd.f32 %v1171, %v1253
      %v1255 = vpop.f32.mrb[0].mxu0
      %v1256 = vadd.f32 %v1173, %v1255
      %v1257 = vpop.f32.mrb[0].mxu0
      %v1258 = vadd.f32 %v1175, %v1257
      %1259 = vmatprep.mubr.bf16.mxu0 %v452
      %1260 = vmatmul.mubr.bf16.gmra.mrb[0].mxu0 %v451
      %v1261 = vpop.f32.mrb[0].mxu0
      %v1262 = vadd.f32 %v1179, %v1261
      %v1263 = vpop.f32.mrb[0].mxu0
      %v1264 = vadd.f32 %v1181, %v1263
      %v1265 = vpop.f32.mrb[0].mxu0
      %v1266 = vadd.f32 %v1183, %v1265
      %v1267 = vpop.f32.mrb[0].mxu0
      %v1268 = vadd.f32 %v1185, %v1267
      %1269 = vmatprep.mubr.bf16.mxu0 %v460
      %1270 = vmatmul.mubr.bf16.gmra.mrb[0].mxu0 %v459
      %v1271 = vpop.f32.mrb[0].mxu0
      %v1272 = vadd.f32 %v1189, %v1271
      %v1273 = vpop.f32.mrb[0].mxu0
      %v1274 = vadd.f32 %v1191, %v1273
      %v1275 = vpop.f32.mrb[0].mxu0
      %v1276 = vadd.f32 %v1193, %v1275
      %v1277 = vpop.f32.mrb[0].mxu0
      %v1278 = vadd.f32 %v1195, %v1277
      %1279 = vmatprep.mubr.bf16.mxu0 %v468
      %1280 = vmatmul.mubr.bf16.gmra.mrb[0].mxu0 %v467
      %v1281 = vpop.f32.mrb[0].mxu0
      %v1282 = vadd.f32 %v1199, %v1281
      %v1283 = vpop.f32.mrb[0].mxu0
      %v1284 = vadd.f32 %v1201, %v1283
      %v1285 = vpop.f32.mrb[0].mxu0
      %v1286 = vadd.f32 %v1203, %v1285
      %v1287 = vpop.f32.mrb[0].mxu0
      %v1288 = vadd.f32 %v1205, %v1287
      %1289 = vdwg.mxu0
      %1290 = vmatprep.subr.bf16.mxu0 %v933
      %1291 = vmatpush1.bf16.msra.mxu0 %v932
      %1292 = vmatprep.subr.bf16.mxu0 %v935
      %1293 = vmatpush1.bf16.msra.mxu0 %v934
      %1294 = vmatprep.subr.bf16.mxu0 %v937
      %1295 = vmatpush1.bf16.msra.mxu0 %v936
      %1296 = vmatprep.subr.bf16.mxu0 %v939
      %1297 = vmatpush1.bf16.msra.mxu0 %v938
      %1298 = vmatprep.subr.bf16.mxu0 %v941
      %1299 = vmatpush1.bf16.msra.mxu0 %v940
      %1300 = vmatprep.subr.bf16.mxu0 %v943
      %1301 = vmatpush1.bf16.msra.mxu0 %v942
      %1302 = vmatprep.subr.bf16.mxu0 %v945
      %1303 = vmatpush1.bf16.msra.mxu0 %v944
      %1304 = vmatprep.subr.bf16.mxu0 %v947
      %1305 = vmatpush1.bf16.msra.mxu0 %v946
      %1306 = vmatprep.subr.bf16.mxu0 %v949
      %1307 = vmatpush1.bf16.msra.mxu0 %v948
      %1308 = vmatprep.subr.bf16.mxu0 %v951
      %1309 = vmatpush1.bf16.msra.mxu0 %v950
      %1310 = vmatprep.subr.bf16.mxu0 %v953
      %1311 = vmatpush1.bf16.msra.mxu0 %v952
      %1312 = vmatprep.subr.bf16.mxu0 %v955
      %1313 = vmatpush1.bf16.msra.mxu0 %v954
      %1314 = vmatprep.subr.bf16.mxu0 %v957
      %1315 = vmatpush1.bf16.msra.mxu0 %v956
      %1316 = vmatprep.subr.bf16.mxu0 %v959
      %1317 = vmatpush1.bf16.msra.mxu0 %v958
      %1318 = vmatprep.subr.bf16.mxu0 %v961
      %1319 = vmatpush1.bf16.msra.mxu0 %v960
      %1320 = vmatprep.subr.bf16.mxu0 %v963
      %1321 = vmatpush1.bf16.msra.mxu0 %v962
      %1322 = vmatprep.mubr.bf16.mxu0 %v438
      %1323 = vmatmul.mubr.bf16.gmra.mrb[0].mxu0 %v437
      %v1324 = vpop.f32.mrb[0].mxu0
      %v1325 = vadd.f32 %v1242, %v1324
      %v1326 = vpop.f32.mrb[0].mxu0
      %v1327 = vadd.f32 %v1244, %v1326
      %v1328 = vpop.f32.mrb[0].mxu0
      %v1329 = vadd.f32 %v1246, %v1328
      %v1330 = vpop.f32.mrb[0].mxu0
      %v1331 = vadd.f32 %v1248, %v1330
      %1332 = vmatprep.mubr.bf16.mxu0 %v446
      %1333 = vmatmul.mubr.bf16.gmra.mrb[0].mxu0 %v445
      %v1334 = vpop.f32.mrb[0].mxu0
      %v1335 = vadd.f32 %v1252, %v1334
      %v1336 = vpop.f32.mrb[0].mxu0
      %v1337 = vadd.f32 %v1254, %v1336
      %v1338 = vpop.f32.mrb[0].mxu0
      %v1339 = vadd.f32 %v1256, %v1338
      %v1340 = vpop.f32.mrb[0].mxu0
      %v1341 = vadd.f32 %v1258, %v1340
      %1342 = vmatprep.mubr.bf16.mxu0 %v454
      %1343 = vmatmul.mubr.bf16.gmra.mrb[0].mxu0 %v453
      %v1344 = vpop.f32.mrb[0].mxu0
      %v1345 = vadd.f32 %v1262, %v1344
      %v1346 = vpop.f32.mrb[0].mxu0
      %v1347 = vadd.f32 %v1264, %v1346
      %v1348 = vpop.f32.mrb[0].mxu0
      %v1349 = vadd.f32 %v1266, %v1348
      %v1350 = vpop.f32.mrb[0].mxu0
      %v1351 = vadd.f32 %v1268, %v1350
      %1352 = vmatprep.mubr.bf16.mxu0 %v462
      %1353 = vmatmul.mubr.bf16.gmra.mrb[0].mxu0 %v461
      %v1354 = vpop.f32.mrb[0].mxu0
      %v1355 = vadd.f32 %v1272, %v1354
      %v1356 = vpop.f32.mrb[0].mxu0
      %v1357 = vadd.f32 %v1274, %v1356
      %v1358 = vpop.f32.mrb[0].mxu0
      %v1359 = vadd.f32 %v1276, %v1358
      %v1360 = vpop.f32.mrb[0].mxu0
      %v1361 = vadd.f32 %v1278, %v1360
      %1362 = vmatprep.mubr.bf16.mxu0 %v470
      %1363 = vmatmul.mubr.bf16.gmra.mrb[0].mxu0 %v469
      %v1364 = vpop.f32.mrb[0].mxu0
      %v1365 = vadd.f32 %v1282, %v1364
      %v1366 = vpop.f32.mrb[0].mxu0
      %v1367 = vadd.f32 %v1284, %v1366
      %v1368 = vpop.f32.mrb[0].mxu0
      %v1369 = vadd.f32 %v1286, %v1368
      %v1370 = vpop.f32.mrb[0].mxu0
      %v1371 = vadd.f32 %v1288, %v1370
      %1372 = vdwg.mxu0
      %1373 = vmatprep.subr.bf16.mxu0 %v965
      %1374 = vmatpush1.bf16.msra.mxu0 %v964
      %1375 = vmatprep.subr.bf16.mxu0 %v967
      %1376 = vmatpush1.bf16.msra.mxu0 %v966
      %1377 = vmatprep.subr.bf16.mxu0 %v969
      %1378 = vmatpush1.bf16.msra.mxu0 %v968
      %1379 = vmatprep.subr.bf16.mxu0 %v971
      %1380 = vmatpush1.bf16.msra.mxu0 %v970
      %1381 = vmatprep.subr.bf16.mxu0 %v973
      %1382 = vmatpush1.bf16.msra.mxu0 %v972
      %1383 = vmatprep.subr.bf16.mxu0 %v975
      %1384 = vmatpush1.bf16.msra.mxu0 %v974
      %1385 = vmatprep.subr.bf16.mxu0 %v977
      %1386 = vmatpush1.bf16.msra.mxu0 %v976
      %1387 = vmatprep.subr.bf16.mxu0 %v979
      %1388 = vmatpush1.bf16.msra.mxu0 %v978
      %1389 = vmatprep.subr.bf16.mxu0 %v981
      %1390 = vmatpush1.bf16.msra.mxu0 %v980
      %1391 = vmatprep.subr.bf16.mxu0 %v983
      %1392 = vmatpush1.bf16.msra.mxu0 %v982
      %1393 = vmatprep.subr.bf16.mxu0 %v985
      %1394 = vmatpush1.bf16.msra.mxu0 %v984
      %1395 = vmatprep.subr.bf16.mxu0 %v987
      %1396 = vmatpush1.bf16.msra.mxu0 %v986
      %1397 = vmatprep.subr.bf16.mxu0 0
      %1398 = vmatpush1.bf16.msra.mxu0 0
      %1399 = vmatprep.subr.bf16.mxu0 0
      %1400 = vmatpush1.bf16.msra.mxu0 0
      %1401 = vmatprep.subr.bf16.mxu0 0
      %1402 = vmatpush1.bf16.msra.mxu0 0
      %1403 = vmatprep.subr.bf16.mxu0 0
      %1404 = vmatpush1.bf16.msra.mxu0 0
      %1405 = vmatprep.mubr.bf16.mxu0 %v1110
      %1406 = vmatmul.mubr.bf16.gmra.mrb[0].mxu0 %v439
      %v1407 = vpop.f32.mrb[0].mxu0
      %v1408 = vadd.f32 %v1325, %v1407
      %v1409 = vpop.f32.mrb[0].mxu0
      %v1410 = vadd.f32 %v1327, %v1409
      %v1411 = vpop.f32.mrb[0].mxu0
      %v1412 = vadd.f32 %v1329, %v1411
      %v1413 = vpop.f32.mrb[0].mxu0
      %v1414 = vadd.f32 %v1331, %v1413
      %1415 = vmatprep.mubr.bf16.mxu0 %v1113
      %1416 = vmatmul.mubr.bf16.gmra.mrb[0].mxu0 %v447
      %v1417 = vpop.f32.mrb[0].mxu0
      %v1418 = vadd.f32 %v1335, %v1417
      %v1419 = vpop.f32.mrb[0].mxu0
      %v1420 = vadd.f32 %v1337, %v1419
      %v1421 = vpop.f32.mrb[0].mxu0
      %v1422 = vadd.f32 %v1339, %v1421
      %v1423 = vpop.f32.mrb[0].mxu0
      %v1424 = vadd.f32 %v1341, %v1423
      %1425 = vmatprep.mubr.bf16.mxu0 %v1116
      %1426 = vmatmul.mubr.bf16.gmra.mrb[0].mxu0 %v455
      %v1427 = vpop.f32.mrb[0].mxu0
      %v1428 = vadd.f32 %v1345, %v1427
      %v1429 = vpop.f32.mrb[0].mxu0
      %v1430 = vadd.f32 %v1347, %v1429
      %v1431 = vpop.f32.mrb[0].mxu0
      %v1432 = vadd.f32 %v1349, %v1431
      %v1433 = vpop.f32.mrb[0].mxu0
      %v1434 = vadd.f32 %v1351, %v1433
      %1435 = vmatprep.mubr.bf16.mxu0 %v1119
      %1436 = vmatmul.mubr.bf16.gmra.mrb[0].mxu0 %v463
      %v1437 = vpop.f32.mrb[0].mxu0
      %v1438 = vadd.f32 %v1355, %v1437
      %v1439 = vpop.f32.mrb[0].mxu0
      %v1440 = vadd.f32 %v1357, %v1439
      %v1441 = vpop.f32.mrb[0].mxu0
      %v1442 = vadd.f32 %v1359, %v1441
      %v1443 = vpop.f32.mrb[0].mxu0
      %v1444 = vadd.f32 %v1361, %v1443
      %1445 = vmatprep.mubr.bf16.mxu0 %v1122
      %1446 = vmatmul.mubr.bf16.gmra.mrb[0].mxu0 %v471
      %v1447 = vpop.f32.mrb[0].mxu0
      %v1448 = vadd.f32 %v1365, %v1447
      %v1449 = vpop.f32.mrb[0].mxu0
      %v1450 = vadd.f32 %v1367, %v1449
      %v1451 = vpop.f32.mrb[0].mxu0
      %v1452 = vadd.f32 %v1369, %v1451
      %v1453 = vpop.f32.mrb[0].mxu0
      %v1454 = vadd.f32 %v1371, %v1453
      %1455 = vdwg.mxu0
      %1456 = vst [vmem:[%s150] sm:$0xff] %v1408
      %vm1457 = vcmask 556032
      %1458 = vst.msk [vmem:[%s150 + $0x8] sm:$0xff] %vm1457, %v1410
      %1459 = vst [vmem:[%s150 + $0x10] sm:$0xff] %v1412
      %1460 = vst.msk [vmem:[%s150 + $0x18] sm:$0xff] %vm1457, %v1414
      %1461 = vst [vmem:[%s150 + $0x20] sm:$0xff] %v1418
      %1462 = vst.msk [vmem:[%s150 + $0x28] sm:$0xff] %vm1457, %v1420
      %1463 = vst [vmem:[%s150 + $0x30] sm:$0xff] %v1422
      %1464 = vst.msk [vmem:[%s150 + $0x38] sm:$0xff] %vm1457, %v1424
      %1465 = vst [vmem:[%s150 + $0x40] sm:$0xff] %v1428
      %1466 = vst.msk [vmem:[%s150 + $0x48] sm:$0xff] %vm1457, %v1430
      %1467 = vst [vmem:[%s150 + $0x50] sm:$0xff] %v1432
      %1468 = vst.msk [vmem:[%s150 + $0x58] sm:$0xff] %vm1457, %v1434
      %1469 = vst [vmem:[%s150 + $0x60] sm:$0xff] %v1438
      %1470 = vst.msk [vmem:[%s150 + $0x68] sm:$0xff] %vm1457, %v1440
      %1471 = vst [vmem:[%s150 + $0x70] sm:$0xff] %v1442
      %1472 = vst.msk [vmem:[%s150 + $0x78] sm:$0xff] %vm1457, %v1444
      %1473 = vst [vmem:[%s150 + $0x80] sm:$0xff] %v1448
      %1474 = vst.msk [vmem:[%s150 + $0x88] sm:$0xff] %vm1457, %v1450
      %1475 = vst [vmem:[%s150 + $0x90] sm:$0xff] %v1452
      %1476 = vst.msk [vmem:[%s150 + $0x98] sm:$0xff] %vm1457, %v1454
      %s1477 = smul.u32 10, %s13
      %p1478 = scmp.lt.s32.totalorder %s1477, 19
      %s1479 = scalar_select %p1478, %s1477, 19
      %s1480 = smul.addr %s1479, 2
      %s1481 = smul.addr %s1480, 8
      %s1482 = scalar_lea.vmem %s2, %s1481
      // Predicated region
      $region29: #{conv2d_1x1.1} parent=27 // pred_check
        %p1483 = pneg %p78
      $region30: #{conv2d_1x1.1} parent=27 // pred_check_branch
        %1485 = sbr.rel (%p1483) target = $region32
      $region31: #{conv2d_1x1.1} parent=27 // pred_region
        %s1486 = smul.u32 10, %s13
      $region32: #{conv2d_1x1.1} parent=27 // pred_fallthru
        _
    $region28: #{conv2d_1x1.1} parent=5 // pred_fallthru
      _
    %p1487 = scmp.le.s32.totalorder 2, %s8
    // Predicated region
    $region33: #{conv2d_1x1.1} parent=5 // pred_check
      %p1488 = pneg %p1487
    $region34: #{conv2d_1x1.1} parent=5 // pred_check_branch
      %1490 = sbr.rel (%p1488) target = $region36
    $region35: #{conv2d_1x1.1} parent=5 // pred_region
      %s1491 = ssub.s32 %s8, 2
      // Predicated region
      $region37: #{conv2d_1x1.1} parent=35 // pred_check
        %p1492 = pneg %p84
      $region38: #{conv2d_1x1.1} parent=35 // pred_check_branch
        %1494 = sbr.rel (%p1492) target = $region40
      $region39: #{conv2d_1x1.1} parent=35 // pred_region
        %s1495 = smul.u32 10, %s14
        %p1496 = scmp.lt.s32.totalorder %s1495, 19
        %s1497 = scalar_select %p1496, %s1495, 19
        %s1498 = smul.addr %s1497, 2
        %s1499 = smul.addr %s1498, 8
        %s1500 = scalar_lea.vmem %s2, %s1499
      $region40: #{conv2d_1x1.1} parent=35 // pred_fallthru
        _
    $region36: #{conv2d_1x1.1} parent=5 // pred_fallthru
      _
  $region6: #{conv2d_1x1.1} parent=0 // loop_footer
    %s12 = sadd.s32 1, %s8
  $region7: #{conv2d_1x1.1} parent=0 // loop_footer_branch
    %7 = sbr.rel target = $region3
  $region8: #{conv2d_1x1.1} parent=0 // loop_exit
    _

</llo_original>
